<compile_context>
chip_gen: v7x
topology: tpu7x:2x2x1
jax: 0.10.0
libtpu: 0.0.40
codegen_flags: <defaults>
</compile_context>

<pallas_src>
import functools

import jax
import jax.numpy as jnp
from jax import lax
from jax.experimental import pallas as pl
from jax.experimental.pallas import tpu as pltpu

_COL_CANDIDATES = (512, 256, 128)        # lane-dense widths (multiples of 128)
_BLOCK_TARGET_ELEMS = 1024 * 512         # ~2 MiB f32 per input block
_VMEM_LIMIT_BYTES = 32 * 1024 * 1024


def _round_down(a: int, b: int) -> int:
    return a // b * b


def _tensorcores_per_chip() -> int:
    """2 TensorCores per chip on v7x-class parts, 1 on v5e/v6e (heuristic sniff)."""
    try:
        kind = jax.devices()[0].device_kind.lower()
    except Exception:
        return 1
    return 2 if ("v7" in kind or "7x" in kind) else 1


def _bce_kernel(pw_ref, x_ref, t_ref, out_ref, *,
                n_inner: int, n_row_blocks: int, block_rows: int, cols: int,
                tail_rows: int, ragged: bool, has_excess: bool,
                label_smoothing: float, has_pw: bool):
    c = pl.program_id(0)   # TensorCore split ("parallel")
    i = pl.program_id(1)   # reduction axis ("arbitrary")

    # The out block's index map is constant along i, so it stays resident in VMEM
    # across the whole reduction: init once at i==0, accumulate every step.
    @pl.when(i == 0)
    def _init():
        out_ref[...] = jnp.zeros_like(out_ref)

    x = x_ref[...].astype(jnp.float32)
    t = t_ref[...].astype(jnp.float32)

    if label_smoothing > 0.0:
        # t*(1-ls) + (1-t)*ls  ==  t*(1-2*ls) + ls   (single FMA)
        t = t * jnp.float32(1.0 - 2.0 * label_smoothing) + jnp.float32(label_smoothing)

    # Numerically stable softplus(x) = max(x,0) + log1p(exp(-|x|)).
    sp_x = jnp.maximum(x, 0.0) + jnp.log1p(jnp.exp(-jnp.abs(x)))

    if has_pw:
        pwt = pw_ref[0] * t
        # == (1-t)*softplus(x) + pos_weight*t*softplus(-x)
        loss = (1.0 - t + pwt) * sp_x - pwt * x
    else:
        # t*softplus(-x) + (1-t)*softplus(x)  ==  softplus(x) - t*x
        loss = sp_x - t * x

    def _accum(v):
        # Sublane-group partial reduce: split-by-8 of the second-to-last dim is
        # layout-preserving, so this is pure cross-vreg VPU adds.  The cross-lane
        # reduce happens on the tiny (ncores*8, cols) partials array in the wrapper.
        out_ref[...] += v.reshape(block_rows // 8, 8, cols).sum(axis=0)

    if not (ragged or has_excess):
        # Hot path: every block fully valid, no mask, no index math.
        _accum(loss)
    else:
        blk = c * n_inner + i
        n_full = n_row_blocks - 1 if ragged else n_row_blocks

        @pl.when(blk < n_full)              # fully-valid blocks: no mask cost
        def _full():
            _accum(loss)

        if ragged:
            @pl.when(blk == n_row_blocks - 1)   # ragged final block only
            def _tail():
                rowid = lax.broadcasted_iota(jnp.int32, (block_rows, cols), 0)
                # select (not multiply) so OOB garbage / NaN cannot poison the sum
                _accum(jnp.where(rowid < tail_rows, loss, 0.0))
        # Excess (clamped duplicate) blocks fall through both `when`s: skipped.


def _bce_fallback(logits, targets, pos_weight, label_smoothing, reduction):
    """Plain-JAX implementation with identical semantics (also used as reference)."""
    x = logits.astype(jnp.float32)
    t = targets.astype(jnp.float32)
    if label_smoothing > 0.0:
        t = t * (1.0 - label_smoothing) + (1.0 - t) * label_smoothing
    sp_x = jnp.maximum(x, 0.0) + jnp.log1p(jnp.exp(-jnp.abs(x)))
    if pos_weight is None:
        loss = sp_x - t * x
    else:
        pw = jnp.asarray(pos_weight, jnp.float32)
        loss = (1.0 - t) * sp_x + pw * t * (sp_x - x)
    if reduction == "mean":
        return jnp.mean(loss)
    if reduction == "sum":
        return jnp.sum(loss)
    return loss   # reduction == 'none'


def bce_with_logits_loss(logits, targets, pos_weight=None,
                         label_smoothing: float = 0.0, reduction: str = "mean"):
    assert 0.0 <= label_smoothing < 1.0, "label_smoothing must be in [0, 1)"
    assert reduction in ("mean", "sum", "none")
    assert logits.shape == targets.shape

    if reduction == "none":
        # TODO(synk): elementwise-output Pallas kernel not wired up; plain JAX here.
        return _bce_fallback(logits, targets, pos_weight, label_smoothing, reduction)

    if pos_weight is not None:
        pw_flat = jnp.asarray(pos_weight, jnp.float32).reshape(-1)
        if pw_flat.size != 1:
            # TODO(synk): per-class (vector) pos_weight kernel not wired up; plain JAX.
            return _bce_fallback(logits, targets, pos_weight, label_smoothing, reduction)
        has_pw = True
        pw = pw_flat
    else:
        has_pw = False
        pw = jnp.ones((1,), jnp.float32)   # streamed (4 bytes) but never read

    n_elems = logits.size

    # Pick a lane-dense width that divides n_elems exactly: the 2-D view is then a
    # free reshape and NO padding copy of the inputs is ever made.
    cols = None
    for cand in _COL_CANDIDATES:
        if n_elems % cand == 0 and n_elems // cand >= 8:
            cols = cand
            break
    if cols is None:
        # Tiny (< 8*128 elements) or not a multiple of 128: streaming a mostly-padded
        # slab through the kernel would cost more than it saves.
        return _bce_fallback(logits, targets, pos_weight, label_smoothing, reduction)

    rows = n_elems // cols
    x2 = logits.reshape(rows, cols)
    t2 = targets.reshape(rows, cols)

    max_block_rows = max(8, _round_down(_BLOCK_TARGET_ELEMS // cols, 8))
    block_rows = min(max_block_rows, _round_down(rows, 8))   # multiple of 8, <= rows
    n_row_blocks = pl.cdiv(rows, block_rows)
    ragged = (rows % block_rows) != 0
    tail_rows = rows - (n_row_blocks - 1) * block_rows

    # 2-wide "parallel" leading axis only on 2-TensorCore chips (v7x) with enough
    # work to split; 1 on v5e/v6e so no extra padding granularity / prologue.
    ncores = _tensorcores_per_chip() if n_row_blocks >= 4 else 1
    n_inner = pl.cdiv(n_row_blocks, ncores)
    has_excess = ncores * n_inner > n_row_blocks

    if has_excess:
        # Clamp the (at most one) excess block onto a valid block index; the kernel
        # skips its accumulation, so it is only one wasted (but safe) DMA.
        def in_idx(c, i):
            return (jnp.minimum(c * n_inner + i, n_row_blocks - 1), 0)
    else:
        def in_idx(c, i):
            return (c * n_inner + i, 0)

    kernel = functools.partial(
        _bce_kernel,
        n_inner=n_inner, n_row_blocks=n_row_blocks, block_rows=block_rows,
        cols=cols, tail_rows=tail_rows, ragged=ragged, has_excess=has_excess,
        label_smoothing=float(label_smoothing), has_pw=has_pw)

    in_bytes = (logits.dtype.itemsize + targets.dtype.itemsize) * n_elems
    cost = pl.CostEstimate(flops=12 * n_elems, transcendentals=2 * n_elems,
                           bytes_accessed=in_bytes)

    partials = pl.pallas_call(
        kernel,
        out_shape=jax.ShapeDtypeStruct((ncores * 8, cols), jnp.float32),
        grid_spec=pltpu.PrefetchScalarGridSpec(
            num_scalar_prefetch=0,
            grid=(ncores, n_inner),
            in_specs=[
                pl.BlockSpec(memory_space=pltpu.MemorySpace.SMEM),   # pos_weight scalar
                pl.BlockSpec((block_rows, cols), in_idx),
                pl.BlockSpec((block_rows, cols), in_idx),
            ],
            out_specs=pl.BlockSpec((8, cols), lambda c, i: (c, 0)),
        ),
        compiler_params=pltpu.CompilerParams(
            dimension_semantics=("parallel", "arbitrary"),
            vmem_limit_bytes=_VMEM_LIMIT_BYTES),
        cost_estimate=cost,
    )(pw, x2, t2)

    total = jnp.sum(partials)
    if reduction == "mean":
        total = total / jnp.float32(n_elems)
    return total


if __name__ == "__main__":
    key = jax.random.PRNGKey(0)

    def _check(shape, pos_weight, label_smoothing, seed):
        k1, k2 = jax.random.split(jax.random.fold_in(key, seed))
        x = jax.random.normal(k1, shape, dtype=jnp.float32) * 2.0
        t = (jax.random.uniform(k2, shape) > 0.5).astype(jnp.float32)
        got = bce_with_logits_loss(x, t, pos_weight=pos_weight,
                                   label_smoothing=label_smoothing, reduction="mean")
        got = jax.block_until_ready(got)
        want = _bce_fallback(x, t, pos_weight, label_smoothing, "mean")
        assert jnp.allclose(got, want, rtol=1e-5, atol=1e-5), (shape, got, want)

    # (2,4,16,16): 2048 elems -> single (8,256) block; pos_weight + label smoothing.
    _check((2, 4, 16, 16), jnp.float32(1.7), 0.1, 0)
    # (6,4,16,16): 6144 elems -> 12 rows of 512, ragged final block (masked path).
    _check((6, 4, 16, 16), None, 0.0, 1)
    # (8,8,128,128): 1M elems -> 2 row blocks, multi-step accumulation over the grid.
    _check((8, 8, 128, 128), jnp.float32(0.5), 0.05, 2)

    print("KERNEL_OK")
</pallas_src>

<mosaic_0001>
module attributes {stable_mosaic.version = 11 : i64} {
  func.func @_bce_kernel(%arg0: i32, %arg1: i32, %arg2: memref<1xf32, #tpu.memory_space<smem>>, %arg3: memref<8x256xf32, #tpu.memory_space<vmem>>, %arg4: memref<8x256xf32, #tpu.memory_space<vmem>>, %arg5: memref<8x256xf32, #tpu.memory_space<vmem>>) attributes {dimension_semantics = [#tpu.dimension_semantics<parallel>, #tpu.dimension_semantics<arbitrary>], iteration_bounds = array<i64: 1, 1>, scalar_prefetch = 0 : i64, scratch_operands = 0 : i64, tpu.core_type = #tpu.core_type<tc>, window_params = [{transform_indices = @transform_0, window_bounds = array<i64: 1>}, {transform_indices = @transform_1, window_bounds = array<i64: 8, 256>}, {transform_indices = @transform_2, window_bounds = array<i64: 8, 256>}, {transform_indices = @transform_3, window_bounds = array<i64: 8, 256>}]} {
    %c0_i32 = arith.constant 0 : i32
    %0 = arith.cmpi eq, %arg1, %c0_i32 : i32
    %1 = arith.extui %0 : i1 to i32
    %c0_i32_0 = arith.constant 0 : i32
    %2 = arith.cmpi ne, %1, %c0_i32_0 : i32
    scf.if %2 {
      %cst_14 = arith.constant 0.000000e+00 : f32
      %31 = vector.broadcast %cst_14 : f32 to vector<8x256xf32>
      %c0_15 = arith.constant 0 : index
      %c0_16 = arith.constant 0 : index
      %32 = vector.load %arg5[%c0_15, %c0_16] : memref<8x256xf32, #tpu.memory_space<vmem>>, vector<8x256xf32>
      tpu.vector_store %arg5[%c0_15, %c0_16], %31 {strides = array<i32>} : memref<8x256xf32, #tpu.memory_space<vmem>>, vector<8x256xf32>,
    } else {
    }
    %c0 = arith.constant 0 : index
    %c0_1 = arith.constant 0 : index
    %3 = vector.load %arg3[%c0, %c0_1] : memref<8x256xf32, #tpu.memory_space<vmem>>, vector<8x256xf32>
    %c0_2 = arith.constant 0 : index
    %c0_3 = arith.constant 0 : index
    %4 = vector.load %arg4[%c0_2, %c0_3] : memref<8x256xf32, #tpu.memory_space<vmem>>, vector<8x256xf32>
    %cst = arith.constant 8.000000e-01 : f32
    %5 = vector.broadcast %cst : f32 to vector<8x256xf32>
    %6 = arith.mulf %4, %5 : vector<8x256xf32>
    %cst_4 = arith.constant 1.000000e-01 : f32
    %7 = vector.broadcast %cst_4 : f32 to vector<8x256xf32>
    %8 = arith.addf %6, %7 : vector<8x256xf32>
    %cst_5 = arith.constant 0.000000e+00 : f32
    %9 = vector.broadcast %cst_5 : f32 to vector<8x256xf32>
    %10 = arith.maximumf %3, %9 : vector<8x256xf32>
    %11 = math.absf %3 : vector<8x256xf32>
    %cst_6 = arith.constant 0.000000e+00 : f32
    %12 = vector.broadcast %cst_6 : f32 to vector<8x256xf32>
    %13 = arith.subf %12, %11 : vector<8x256xf32>
    %14 = math.exp %13 : vector<8x256xf32>
    %15 = math.log1p %14 : vector<8x256xf32>
    %16 = arith.addf %10, %15 : vector<8x256xf32>
    %c0_7 = arith.constant 0 : index
    %17 = memref.load %arg2[%c0_7] : memref<1xf32, #tpu.memory_space<smem>>
    %18 = vector.broadcast %17 : f32 to vector<8x256xf32>
    %19 = arith.mulf %18, %8 : vector<8x256xf32>
    %cst_8 = arith.constant 1.000000e+00 : f32
    %20 = vector.broadcast %cst_8 : f32 to vector<8x256xf32>
    %21 = arith.subf %20, %8 : vector<8x256xf32>
    %22 = arith.addf %21, %19 : vector<8x256xf32>
    %23 = arith.mulf %22, %16 : vector<8x256xf32>
    %24 = arith.mulf %19, %3 : vector<8x256xf32>
    %25 = arith.subf %23, %24 : vector<8x256xf32>
    %c0_9 = arith.constant 0 : index
    %c0_10 = arith.constant 0 : index
    %26 = vector.load %arg5[%c0_9, %c0_10] : memref<8x256xf32, #tpu.memory_space<vmem>>, vector<8x256xf32>
    %27 = vector.shape_cast %25 : vector<8x256xf32> to vector<1x8x256xf32>
    %cst_11 = arith.constant dense<0.000000e+00> : vector<8x256xf32>
    %28 = vector.multi_reduction <add>, %27, %cst_11 [0] : vector<1x8x256xf32> to vector<8x256xf32>
    %29 = arith.addf %26, %28 : vector<8x256xf32>
    %c0_12 = arith.constant 0 : index
    %c0_13 = arith.constant 0 : index
    %30 = vector.load %arg5[%c0_12, %c0_13] : memref<8x256xf32, #tpu.memory_space<vmem>>, vector<8x256xf32>
    tpu.vector_store %arg5[%c0_12, %c0_13], %29 {strides = array<i32>} : memref<8x256xf32, #tpu.memory_space<vmem>>, vector<8x256xf32>,
    return
  }
  func.func @transform_0(%arg0: i32, %arg1: i32) -> i32 {
    %c0_i32 = arith.constant 0 : i32
    %c0_i32_0 = arith.constant 0 : i32
    return %c0_i32 : i32
  }
  func.func @transform_1(%arg0: i32, %arg1: i32) -> (i32, i32) {
    %c1_i32 = arith.constant 1 : i32
    %0 = arith.muli %arg0, %c1_i32 : i32
    %1 = arith.addi %0, %arg1 : i32
    %c0_i32 = arith.constant 0 : i32
    %c0_i32_0 = arith.constant 0 : i32
    return %1, %c0_i32 : i32, i32
  }
  func.func @transform_2(%arg0: i32, %arg1: i32) -> (i32, i32) {
    %c1_i32 = arith.constant 1 : i32
    %0 = arith.muli %arg0, %c1_i32 : i32
    %1 = arith.addi %0, %arg1 : i32
    %c0_i32 = arith.constant 0 : i32
    %c0_i32_0 = arith.constant 0 : i32
    return %1, %c0_i32 : i32, i32
  }
  func.func @transform_3(%arg0: i32, %arg1: i32) -> (i32, i32) {
    %c0_i32 = arith.constant 0 : i32
    %c0_i32_0 = arith.constant 0 : i32
    return %arg0, %c0_i32 : i32, i32
  }
}

</mosaic_0001>

<llo_original>
// kernel: tpu_custom_call.1
$region0: #{tpu_custom_call.1}
  #allocation0 [shape = 'u32[]', space=smem, size = 0x4, offset = 0x4, fixed_abs, tag = 'smem constant byte address 0x4 - core index']
  #allocation1 [shape = 'u32[144,128]{1,0:T(1,128)}', space=vmem, size = 0x12000, scoped, tag = 'internal scratch']
  #allocation2 [shape = 'f32[1]{0:T(128)S(6)}', space=smem, size = 0x200, scoped, tag = 'scoped memory for tpu_custom_call.1']
  %s0 = inlined_call_operand.<no memory space> [shape: f32[1], index: 0, kind: input, shape index: {}]
  %s1 = inlined_call_operand.hbm [shape: f32[8,256], index: 1, kind: input, shape index: {}]
  %s2 = inlined_call_operand.hbm [shape: f32[8,256], index: 2, kind: input, shape index: {}]
  %s3 = inlined_call_operand.hbm [shape: f32[8,256], index: 3, kind: output, shape index: {}]
  %s4 = sld [smem:[#allocation0]]
  $region34: #{tpu_custom_call.1} parent=0
    _
  %s6 = ssub.s32 1, %s4
  %s7 = scalar_select 0, %s6, %s4
  %8 = sst [smem:[#allocation2]] %s0
  $region1: #{tpu_custom_call.1} parent=0
    #allocation3 [shape = 'u8[8192]{0}', space=vmem, size = 0x2000, scoped, tag = 'input window, operand 1, single buffered']
    #allocation4 [shape = 's32[1]{0}', space=sflag, size = 0x4, scoped, tag = 'scoped memory for tpu_custom_call.1']
    #allocation5 [shape = 's32[1]{0}', space=sflag, size = 0x4, scoped, tag = 'scoped memory for tpu_custom_call.1']
    #allocation6 [shape = 'u8[8192]{0}', space=vmem, size = 0x2000, scoped, tag = 'input window, operand 2, single buffered']
    #allocation7 [shape = 's32[1]{0}', space=sflag, size = 0x4, scoped, tag = 'scoped memory for tpu_custom_call.1']
    #allocation8 [shape = 'u8[8192]{0}', space=vmem, size = 0x2000, scoped, tag = 'output window, operand 0, single buffered']
    %9 = vsyncpa [#allocation4], 0
    %10 = vsyncpa [#allocation7], 0
    %11 = vsyncpa [#allocation5], 0
    // Predicated region
    $region2: #{tpu_custom_call.1} parent=1 // pred_check
      _
    $region3: #{tpu_custom_call.1} parent=1 // pred_check_branch
      %13 = sbr.rel (0) target = $region5
    $region4: #{tpu_custom_call.1} parent=1 // pred_region
      _
    $region5: #{tpu_custom_call.1} parent=1 // pred_fallthru
      _
    // Predicated region
    $region6: #{tpu_custom_call.1} parent=1 // pred_check
      _
    $region7: #{tpu_custom_call.1} parent=1 // pred_check_branch
      %15 = sbr.rel (0) target = $region9
    $region8: #{tpu_custom_call.1} parent=1 // pred_region
      %s16 = sadd.s32 0, 0
      %s18 = ssub.s32 256, 256
      %19 = vsyncadd [#allocation4], %s18
      %s20 = smul.addr %s16, 2
      %s21 = smul.addr %s20, 128
      %s22 = scalar_lea.hbm %s1, %s21
      %s24 = sshll.u32 [#allocation3], 4
      %s25 = int_to_ptr.vmem [resolvable:$true] %s24
      %27 = dma.hbm_to_vmem [thread:$0]  %s22, 256, %s25, [#allocation4]
    $region9: #{tpu_custom_call.1} parent=1 // pred_fallthru
      _
    // Predicated region
    $region10: #{tpu_custom_call.1} parent=1 // pred_check
      _
    $region11: #{tpu_custom_call.1} parent=1 // pred_check_branch
      %29 = sbr.rel (0) target = $region13
    $region12: #{tpu_custom_call.1} parent=1 // pred_region
      %s30 = sadd.s32 0, 0
      %s32 = ssub.s32 256, 256
      %33 = vsyncadd [#allocation7], %s32
      %s34 = smul.addr %s30, 2
      %s35 = smul.addr %s34, 128
      %s36 = scalar_lea.hbm %s2, %s35
      %s38 = sshll.u32 [#allocation6], 4
      %s39 = int_to_ptr.vmem [resolvable:$true] %s38
      %41 = dma.hbm_to_vmem [thread:$0]  %s36, 256, %s39, [#allocation7]
    $region13: #{tpu_custom_call.1} parent=1 // pred_fallthru
      _
    // Predicated region
    $region14: #{tpu_custom_call.1} parent=1 // pred_check
      _
    $region15: #{tpu_custom_call.1} parent=1 // pred_check_branch
      %43 = sbr.rel (0) target = $region17
    $region16: #{tpu_custom_call.1} parent=1 // pred_region
      %44 = dma.done [#allocation4], 256
    $region17: #{tpu_custom_call.1} parent=1 // pred_fallthru
      _
    // Predicated region
    $region18: #{tpu_custom_call.1} parent=1 // pred_check
      _
    $region19: #{tpu_custom_call.1} parent=1 // pred_check_branch
      %46 = sbr.rel (0) target = $region21
    $region20: #{tpu_custom_call.1} parent=1 // pred_region
      %47 = dma.done [#allocation7], 256
    $region21: #{tpu_custom_call.1} parent=1 // pred_fallthru
      _
    %s48 = sadd.s32 0, 0
    %s49 = sadd.s32 0, 0
    %p50 = scmp.eq.s32.totalorder 0, 0
    // Predicated region
    $region22: #{tpu_custom_call.1} parent=1 // pred_check
      %p51 = pneg %p50
    $region23: #{tpu_custom_call.1} parent=1 // pred_check_branch
      %53 = sbr.rel (%p51) target = $region25
    $region24: #{tpu_custom_call.1} parent=1 // pred_region
      %54 = vst [vmem:[#allocation8] sm:$0xff] 0.0
      %55 = vst [vmem:[#allocation8 + $0x8] sm:$0xff] 0.0
    $region25: #{tpu_custom_call.1} parent=1 // pred_fallthru
      _
    %v56 = vld [vmem:[#allocation3] sm:$0xff]
    %v57 = vld [vmem:[#allocation3 + $0x8] sm:$0xff]
    %v58 = vld [vmem:[#allocation6] sm:$0xff]
    %v59 = vld [vmem:[#allocation6 + $0x8] sm:$0xff]
    %v60 = vmul.f32 %v58, 0.8
    %v61 = vmul.f32 %v59, 0.8
    %v62 = vadd.f32 %v60, 0.1
    %v63 = vadd.f32 %v61, 0.1
    %v64 = vmax.f32 %v56, 0.0
    %v65 = vmax.f32 %v57, 0.0
    %v66 = vand.u32 2147483647, %v56
    %v67 = vand.u32 2147483647, %v57
    %v68 = vsub.f32 0.0, %v66
    %v69 = vsub.f32 0.0, %v67
    %v70 = vmul.f32 %v68, 1.442695
    %v71 = vpow.pop %v70
    %v72 = vmul.f32 %v69, 1.442695
    %v73 = vpow.pop %v72
    %v74 = vadd.f32 %v71, 1.0
    %v75 = vlog2.pop %v74
    %v76 = vmul.f32 %v75, 0.6931472
    %v77 = vmul.f32 -0.5, %v71
    %v78 = vadd.f32 %v77, 1.0
    %v79 = vmul.f32 %v78, %v71
    %v80 = vand.u32 2147483647, %v71
    %vm81 = vcmp.lt.f32.partialorder %v80, 0.0004427343
    %v82 = vsel %vm81, %v79, %v76
    %v83 = vadd.f32 %v73, 1.0
    %v84 = vlog2.pop %v83
    %v85 = vmul.f32 %v84, 0.6931472
    %v86 = vmul.f32 -0.5, %v73
    %v87 = vadd.f32 %v86, 1.0
    %v88 = vmul.f32 %v87, %v73
    %v89 = vand.u32 2147483647, %v73
    %vm90 = vcmp.lt.f32.partialorder %v89, 0.0004427343
    %v91 = vsel %vm90, %v88, %v85
    %v92 = vadd.f32 %v64, %v82
    %v93 = vadd.f32 %v65, %v91
    %s94 = sld [smem:[#allocation2]]
    %v95 = vstv %s94
    %v96 = vmul.f32 %v95, %v62
    %v97 = vmul.f32 %v95, %v63
    %v98 = vsub.f32 1.0, %v62
    %v99 = vsub.f32 1.0, %v63
    %v100 = vadd.f32 %v98, %v96
    %v101 = vadd.f32 %v99, %v97
    %v102 = vmul.f32 %v100, %v92
    %v103 = vmul.f32 %v101, %v93
    %v104 = vmul.f32 %v96, %v56
    %v105 = vmul.f32 %v97, %v57
    %v106 = vsub.f32 %v102, %v104
    %v107 = vsub.f32 %v103, %v105
    %v108 = vld [vmem:[#allocation8] sm:$0xff]
    %v109 = vld [vmem:[#allocation8 + $0x8] sm:$0xff]
    %v110 = vadd.f32 %v106, 0.0
    %v111 = vadd.f32 %v107, 0.0
    %v112 = vadd.f32 %v108, %v110
    %v113 = vadd.f32 %v109, %v111
    %114 = vst [vmem:[#allocation8] sm:$0xff] %v112
    %115 = vst [vmem:[#allocation8 + $0x8] sm:$0xff] %v113
    // Predicated region
    $region26: #{tpu_custom_call.1} parent=1 // pred_check
      _
    $region27: #{tpu_custom_call.1} parent=1 // pred_check_branch
      %117 = sbr.rel (0) target = $region29
    $region28: #{tpu_custom_call.1} parent=1 // pred_region
      %s119 = ssub.s32 256, 256
      %120 = vsyncadd [#allocation5], %s119
      %s122 = sshll.u32 [#allocation8], 4
      %s123 = int_to_ptr.vmem [resolvable:$true] %s122
      %125 = dma.vmem_to_hbm [thread:$0]  %s123, 256, %s3, [#allocation5]
    $region29: #{tpu_custom_call.1} parent=1 // pred_fallthru
      _
    // Predicated region
    $region30: #{tpu_custom_call.1} parent=1 // pred_check
      _
    $region31: #{tpu_custom_call.1} parent=1 // pred_check_branch
      %127 = sbr.rel (0) target = $region33
    $region32: #{tpu_custom_call.1} parent=1 // pred_region
      %128 = dma.done [#allocation5], 256
    $region33: #{tpu_custom_call.1} parent=1 // pred_fallthru
      _
    %129 = vsyncpa [#allocation4], 1
    %130 = vsyncpa [#allocation7], 1
    %131 = vsyncpa [#allocation5], 1

</llo_original>
